<compile_context>
chip_gen: v5e
topology: v5e:2x2
jax: 0.10.0
libtpu: 0.0.40
codegen_flags: <defaults>
</compile_context>

<pallas_src>
import math
import numpy as np
import jax
import jax.numpy as jnp
from jax.experimental import pallas as pl
from jax.experimental.pallas import tpu as pltpu


def _make_rnn_chunk_kernel(TK, B, D, H):
    """Kernel factory: one grid step == one chunk of TK timesteps."""

    def kernel(x_ref, len_ref, wih_ref, b_ref, whh_ref,
               out_ref, hN_ref, h_scratch):
        # x_ref:     (B, TK*D)  lane-dense raw inputs for this chunk (f32)
        # len_ref:   (B, 1)     sequence lengths (int32)
        # wih_ref:   (D, H)     W_ih^T (f32)
        # b_ref:     (1, H)     b_ih + b_hh (f32)
        # whh_ref:   (H, H)     W_hh^T (bf16, MXU-native)
        # out_ref:   (B, TK*H)  lane-dense output block for this chunk
        # hN_ref:    (B, H)     final hidden; grid-resident (constant block idx)
        # h_scratch: (B, H) f32 recurrent state, persists across chunks
        c = pl.program_id(0)

        @pl.when(c == 0)
        def _():
            h_scratch[...] = jnp.zeros_like(h_scratch)
            hN_ref[...] = jnp.zeros_like(hN_ref)

        h = h_scratch[...]                       # (B, H) f32
        whh = whh_ref[...]                       # (H, H) bf16, loaded once/chunk
        wih = wih_ref[...]                       # (D, H) f32
        bias = b_ref[...]                        # (1, H) f32
        lens = len_ref[...]                      # (B, 1) int32
        t0 = c * TK

        # Statically-unrolled inner loop.  Serial critical path per step is
        # only: bf16 cast -> (B,H)x(H,H) MXU dot -> add p_k -> tanh.
        # Projection, masking and hN capture do not depend on h and are
        # scheduled off the chain by the LLO scheduler.
        for k in range(TK):
            t = t0 + k

            # Off-chain fused input projection for this step.
            x_k = x_ref[:, k * D:(k + 1) * D]                     # (B, D)
            p_k = jnp.dot(x_k, wih,
                          preferred_element_type=jnp.float32) + bias

            # Critical chain.
            h_new = jnp.tanh(
                p_k + jnp.dot(h.astype(jnp.bfloat16), whh,
                              preferred_element_type=jnp.float32))

            # Off-chain: masked output store + last-valid hidden capture.
            valid = t < lens                                      # (B, 1) bool
            out_ref[:, k * H:(k + 1) * H] = jnp.where(
                valid, h_new, 0.0).astype(out_ref.dtype)
            hN_ref[...] = jnp.where(t == lens - 1, h_new,
                                    hN_ref[...]).astype(hN_ref.dtype)

            # No select on the recurrence: invalid steps only ever produce
            # values that are masked out above / never captured into hN.
            h = h_new

        h_scratch[...] = h

    return kernel


def packed_rnn_forward(inputs, seqlens, w_ih, w_hh, b_ih, b_hh):
    """inputs: (B, T, D) batch_first, seqlens: host numpy int array (B,).

    Returns (output, hidden):
        output: (B, max(seqlens), H)
        hidden: (1, B, H)
    """
    B, T, D = inputs.shape
    H = w_ih.shape[0]
    seqlens_np = np.asarray(seqlens)
    T_out = int(seqlens_np.max())               # static, like the torch wrapper

    cdiv = lambda a, b: (a + b - 1) // b
    # Timesteps per chunk must make both TK*D and TK*H multiples of 128 so the
    # lane-dense x / output blocks get unmasked 128-lane DMA and stores.
    u_d = 128 // math.gcd(D, 128)
    u_h = 128 // math.gcd(H, 128)
    unit = (u_d * u_h) // math.gcd(u_d, u_h)    # lcm
    cap = 64                                    # amortize per-grid-step overhead
    TK = unit * cdiv(min(T_out, cap), unit)
    n_chunks = cdiv(T_out, TK)
    T_pad = n_chunks * TK

    f32 = jnp.float32
    wihT = jnp.transpose(w_ih).astype(f32)              # (D, H)  f32 (off-chain)
    whhT_bf = jnp.transpose(w_hh).astype(jnp.bfloat16)  # (H, H)  bf16 (on-chain)
    bias2d = (b_ih + b_hh).astype(f32)[None, :]         # (1, H)
    lens2d = jnp.asarray(seqlens_np, jnp.int32)[:, None]  # (B, 1)

    # Lane-dense, batch-first x: free reshape, no transposes, no HBM P array.
    x = inputs[:, :T_out, :].astype(f32)                 # (B, T_out, D)
    if T_pad > T_out:
        x = jnp.pad(x, ((0, 0), (0, T_pad - T_out), (0, 0)))
    x_dense = x.reshape(B, T_pad * D)

    kernel = _make_rnn_chunk_kernel(TK, B, D, H)

    out2d, hN = pl.pallas_call(
        kernel,
        out_shape=(jax.ShapeDtypeStruct((B, T_pad * H), inputs.dtype),
                   jax.ShapeDtypeStruct((B, H), inputs.dtype)),
        grid_spec=pltpu.PrefetchScalarGridSpec(
            num_scalar_prefetch=0,
            grid=(n_chunks,),
            in_specs=[
                pl.BlockSpec((B, TK * D), lambda c: (0, c)),  # x chunk (dense)
                pl.BlockSpec((B, 1), lambda c: (0, 0)),       # seqlens
                pl.BlockSpec((D, H), lambda c: (0, 0)),       # W_ih^T
                pl.BlockSpec((1, H), lambda c: (0, 0)),       # bias
                pl.BlockSpec((H, H), lambda c: (0, 0)),       # W_hh^T (bf16)
            ],
            out_specs=[
                pl.BlockSpec((B, TK * H), lambda c: (0, c)),  # lane-dense out
                pl.BlockSpec((B, H), lambda c: (0, 0)),       # final hidden
            ],
            scratch_shapes=[pltpu.VMEM((B, H), jnp.float32)],
        ),
        compiler_params=pltpu.CompilerParams(
            dimension_semantics=("arbitrary",)),              # serial recurrence
    )(x_dense, lens2d, wihT, bias2d, whhT_bf)

    output = out2d.reshape(B, T_pad, H)[:, :T_out]   # free reshape, batch_first
    hidden = hN[None]                                # (1, B, H)
    return output, hidden


def _reference_forward(inputs, seqlens, w_ih, w_hh, b_ih, b_hh):
    """Pure-JAX f32 reference of the same masked RNN semantics."""
    B, T, D = inputs.shape
    H = w_ih.shape[0]
    T_out = int(np.max(np.asarray(seqlens)))
    lens = jnp.asarray(np.asarray(seqlens), jnp.int32)

    def step(h, xt_t):
        xt, t = xt_t
        h_new = jnp.tanh(xt @ w_ih.T + b_ih + h @ w_hh.T + b_hh)
        valid = (t < lens)[:, None]
        h_next = jnp.where(valid, h_new, h)
        out_t = jnp.where(valid, h_new, 0.0)
        return h_next, out_t

    x_tbd = jnp.transpose(inputs, (1, 0, 2))[:T_out]
    h0 = jnp.zeros((B, H), jnp.float32)
    hN, out = jax.lax.scan(step, h0, (x_tbd, jnp.arange(T_out)))
    return jnp.transpose(out, (1, 0, 2)), hN[None]


if __name__ == "__main__":
    B, T, D, H = 8, 8, 16, 32
    key = jax.random.PRNGKey(0)
    k1, k2, k3, k4, k5 = jax.random.split(key, 5)

    # Deterministic parameter init matching nn.RNN's U(-1/sqrt(H), 1/sqrt(H)).
    bound = 1.0 / np.sqrt(H)
    w_ih = jax.random.uniform(k1, (H, D), jnp.float32, -bound, bound)
    w_hh = jax.random.uniform(k2, (H, H), jnp.float32, -bound, bound)
    b_ih = jax.random.uniform(k3, (H,), jnp.float32, -bound, bound)
    b_hh = jax.random.uniform(k4, (H,), jnp.float32, -bound, bound)

    inputs = jax.random.normal(k5, (B, T, D), jnp.float32)
    seqlens = np.array([8, 5, 3, 8, 1, 6, 8, 2], dtype=np.int64)

    output, hidden = packed_rnn_forward(inputs, seqlens, w_ih, w_hh, b_ih, b_hh)
    output = jax.block_until_ready(output)
    hidden = jax.block_until_ready(hidden)

    out_ref, hid_ref = _reference_forward(inputs, seqlens, w_ih, w_hh, b_ih, b_hh)
    assert output.shape == (B, int(seqlens.max()), H)
    assert hidden.shape == (1, B, H)
    # Tolerance relaxed vs. the pure-f32 version: the recurrence matmul now
    # uses bf16 MXU operands (f32 accumulation), per the performance review.
    np.testing.assert_allclose(np.asarray(output), np.asarray(out_ref),
                               rtol=2e-2, atol=2e-2)
    np.testing.assert_allclose(np.asarray(hidden), np.asarray(hid_ref),
                               rtol=2e-2, atol=2e-2)
    print("KERNEL_OK")
</pallas_src>

<mosaic_0001>
module attributes {stable_mosaic.version = 11 : i64} {
  func.func @kernel(%arg0: i32, %arg1: memref<8x128xf32, #tpu.memory_space<vmem>>, %arg2: memref<8x1xi32, #tpu.memory_space<vmem>>, %arg3: memref<16x32xf32, #tpu.memory_space<vmem>>, %arg4: memref<1x32xf32, #tpu.memory_space<vmem>>, %arg5: memref<32x32xbf16, #tpu.memory_space<vmem>>, %arg6: memref<8x256xf32, #tpu.memory_space<vmem>>, %arg7: memref<8x32xf32, #tpu.memory_space<vmem>>, %arg8: memref<8x32xf32, #tpu.memory_space<vmem>>) attributes {dimension_semantics = [#tpu.dimension_semantics<arbitrary>], iteration_bounds = array<i64: 1>, scalar_prefetch = 0 : i64, scratch_operands = 1 : i64, tpu.core_type = #tpu.core_type<tc>, window_params = [{transform_indices = @transform_0, window_bounds = array<i64: 8, 128>}, {pipeline_mode = #tpu.pipeline_mode<synchronous>, transform_indices = @transform_1, window_bounds = array<i64: 8, 1>}, {pipeline_mode = #tpu.pipeline_mode<synchronous>, transform_indices = @transform_2, window_bounds = array<i64: 16, 32>}, {pipeline_mode = #tpu.pipeline_mode<synchronous>, transform_indices = @transform_3, window_bounds = array<i64: 1, 32>}, {pipeline_mode = #tpu.pipeline_mode<synchronous>, transform_indices = @transform_4, window_bounds = array<i64: 32, 32>}, {transform_indices = @transform_5, window_bounds = array<i64: 8, 256>}, {pipeline_mode = #tpu.pipeline_mode<synchronous>, transform_indices = @transform_6, window_bounds = array<i64: 8, 32>}]} {
    %c0_i32 = arith.constant 0 : i32
    %0 = arith.cmpi eq, %arg0, %c0_i32 : i32
    %1 = arith.extui %0 : i1 to i32
    %c0_i32_0 = arith.constant 0 : i32
    %2 = arith.cmpi ne, %1, %c0_i32_0 : i32
    scf.if %2 {
      %cst_97 = arith.constant 0.000000e+00 : f32
      %210 = vector.broadcast %cst_97 : f32 to vector<8x32xf32>
      %c0_98 = arith.constant 0 : index
      %c0_99 = arith.constant 0 : index
      %211 = vector.load %arg8[%c0_98, %c0_99] : memref<8x32xf32, #tpu.memory_space<vmem>>, vector<8x32xf32>
      tpu.vector_store %arg8[%c0_98, %c0_99], %210 {strides = array<i32>} : memref<8x32xf32, #tpu.memory_space<vmem>>, vector<8x32xf32>,
      %cst_100 = arith.constant 0.000000e+00 : f32
      %212 = vector.broadcast %cst_100 : f32 to vector<8x32xf32>
      %c0_101 = arith.constant 0 : index
      %c0_102 = arith.constant 0 : index
      %213 = vector.load %arg7[%c0_101, %c0_102] : memref<8x32xf32, #tpu.memory_space<vmem>>, vector<8x32xf32>
      tpu.vector_store %arg7[%c0_101, %c0_102], %212 {strides = array<i32>} : memref<8x32xf32, #tpu.memory_space<vmem>>, vector<8x32xf32>,
    } else {
    }
    %c0 = arith.constant 0 : index
    %c0_1 = arith.constant 0 : index
    %3 = vector.load %arg8[%c0, %c0_1] : memref<8x32xf32, #tpu.memory_space<vmem>>, vector<8x32xf32>
    %c0_2 = arith.constant 0 : index
    %c0_3 = arith.constant 0 : index
    %4 = vector.load %arg5[%c0_2, %c0_3] : memref<32x32xbf16, #tpu.memory_space<vmem>>, vector<32x32xbf16>
    %c0_4 = arith.constant 0 : index
    %c0_5 = arith.constant 0 : index
    %5 = vector.load %arg3[%c0_4, %c0_5] : memref<16x32xf32, #tpu.memory_space<vmem>>, vector<16x32xf32>
    %c0_6 = arith.constant 0 : index
    %c0_7 = arith.constant 0 : index
    %6 = vector.load %arg4[%c0_6, %c0_7] : memref<1x32xf32, #tpu.memory_space<vmem>>, vector<1x32xf32>
    %c0_8 = arith.constant 0 : index
    %c0_9 = arith.constant 0 : index
    %7 = vector.load %arg2[%c0_8, %c0_9] : memref<8x1xi32, #tpu.memory_space<vmem>>, vector<8x1xi32>
    %c8_i32 = arith.constant 8 : i32
    %8 = arith.muli %arg0, %c8_i32 : i32
    %c0_i32_10 = arith.constant 0 : i32
    %9 = arith.addi %8, %c0_i32_10 : i32
    %c0_11 = arith.constant 0 : index
    %c0_12 = arith.constant 0 : index
    %10 = vector.load %arg1[%c0_11, %c0_12] : memref<8x128xf32, #tpu.memory_space<vmem>>, vector<8x16xf32>
    %cst = arith.constant dense<0.000000e+00> : vector<8x32xf32>
    %11 = tpu.matmul %10, %5, %cst {dimension_numbers = #tpu.dot_dimension_numbers<[1], [0], [0], [1], [0, 0, 1, 1], [], []>} : vector<8x16xf32>, vector<16x32xf32>, vector<8x32xf32> -> vector<8x32xf32>
    %12 = vector.broadcast %6 : vector<1x32xf32> to vector<8x32xf32>
    %13 = arith.addf %11, %12 : vector<8x32xf32>
    %14 = arith.truncf %3 : vector<8x32xf32> to vector<8x32xbf16>
    %cst_13 = arith.constant dense<0.000000e+00> : vector<8x32xf32>
    %15 = tpu.matmul %14, %4, %cst_13 {dimension_numbers = #tpu.dot_dimension_numbers<[1], [0], [0], [1], [0, 0, 1, 1], [], []>} : vector<8x32xbf16>, vector<32x32xbf16>, vector<8x32xf32> -> vector<8x32xf32>
    %16 = arith.addf %13, %15 : vector<8x32xf32>
    %17 = math.tanh %16 : vector<8x32xf32>
    %18 = vector.broadcast %9 : i32 to vector<8x1xi32>
    %19 = arith.cmpi slt, %18, %7 : vector<8x1xi32>
    %cst_14 = arith.constant 0.000000e+00 : f32
    %20 = vector.shape_cast %19 : vector<8x1xi1> to vector<8x1xi1>
    %21 = vector.broadcast %20 : vector<8x1xi1> to vector<8x32xi1>
    %22 = vector.broadcast %cst_14 : f32 to vector<8x32xf32>
    %23 = arith.select %21, %17, %22 : vector<8x32xi1>, vector<8x32xf32>
    %c0_15 = arith.constant 0 : index
    %c0_16 = arith.constant 0 : index
    %24 = vector.load %arg6[%c0_15, %c0_16] : memref<8x256xf32, #tpu.memory_space<vmem>>, vector<8x32xf32>
    tpu.vector_store %arg6[%c0_15, %c0_16], %23 {strides = array<i32>} : memref<8x256xf32, #tpu.memory_space<vmem>>, vector<8x32xf32>,
    %c1_i32 = arith.constant 1 : i32
    %25 = vector.broadcast %c1_i32 : i32 to vector<8x1xi32>
    %26 = arith.subi %7, %25 : vector<8x1xi32>
    %27 = vector.broadcast %9 : i32 to vector<8x1xi32>
    %28 = arith.cmpi eq, %27, %26 : vector<8x1xi32>
    %c0_17 = arith.constant 0 : index
    %c0_18 = arith.constant 0 : index
    %29 = vector.load %arg7[%c0_17, %c0_18] : memref<8x32xf32, #tpu.memory_space<vmem>>, vector<8x32xf32>
    %30 = vector.shape_cast %28 : vector<8x1xi1> to vector<8x1xi1>
    %31 = vector.broadcast %30 : vector<8x1xi1> to vector<8x32xi1>
    %32 = arith.select %31, %17, %29 : vector<8x32xi1>, vector<8x32xf32>
    %c0_19 = arith.constant 0 : index
    %c0_20 = arith.constant 0 : index
    %33 = vector.load %arg7[%c0_19, %c0_20] : memref<8x32xf32, #tpu.memory_space<vmem>>, vector<8x32xf32>
    tpu.vector_store %arg7[%c0_19, %c0_20], %32 {strides = array<i32>} : memref<8x32xf32, #tpu.memory_space<vmem>>, vector<8x32xf32>,
    %c1_i32_21 = arith.constant 1 : i32
    %34 = arith.addi %8, %c1_i32_21 : i32
    %c0_22 = arith.constant 0 : index
    %c16 = arith.constant 16 : index
    %35 = vector.load %arg1[%c0_22, %c16] : memref<8x128xf32, #tpu.memory_space<vmem>>, vector<8x16xf32>
    %cst_23 = arith.constant dense<0.000000e+00> : vector<8x32xf32>
    %36 = tpu.matmul %35, %5, %cst_23 {dimension_numbers = #tpu.dot_dimension_numbers<[1], [0], [0], [1], [0, 0, 1, 1], [], []>} : vector<8x16xf32>, vector<16x32xf32>, vector<8x32xf32> -> vector<8x32xf32>
    %37 = vector.broadcast %6 : vector<1x32xf32> to vector<8x32xf32>
    %38 = arith.addf %36, %37 : vector<8x32xf32>
    %39 = arith.truncf %17 : vector<8x32xf32> to vector<8x32xbf16>
    %cst_24 = arith.constant dense<0.000000e+00> : vector<8x32xf32>
    %40 = tpu.matmul %39, %4, %cst_24 {dimension_numbers = #tpu.dot_dimension_numbers<[1], [0], [0], [1], [0, 0, 1, 1], [], []>} : vector<8x32xbf16>, vector<32x32xbf16>, vector<8x32xf32> -> vector<8x32xf32>
    %41 = arith.addf %38, %40 : vector<8x32xf32>
    %42 = math.tanh %41 : vector<8x32xf32>
    %43 = vector.broadcast %34 : i32 to vector<8x1xi32>
    %44 = arith.cmpi slt, %43, %7 : vector<8x1xi32>
    %cst_25 = arith.constant 0.000000e+00 : f32
    %45 = vector.shape_cast %44 : vector<8x1xi1> to vector<8x1xi1>
    %46 = vector.broadcast %45 : vector<8x1xi1> to vector<8x32xi1>
    %47 = vector.broadcast %cst_25 : f32 to vector<8x32xf32>
    %48 = arith.select %46, %42, %47 : vector<8x32xi1>, vector<8x32xf32>
    %c0_26 = arith.constant 0 : index
    %c32 = arith.constant 32 : index
    %49 = vector.load %arg6[%c0_26, %c32] : memref<8x256xf32, #tpu.memory_space<vmem>>, vector<8x32xf32>
    tpu.vector_store %arg6[%c0_26, %c32], %48 {strides = array<i32>} : memref<8x256xf32, #tpu.memory_space<vmem>>, vector<8x32xf32>,
    %c1_i32_27 = arith.constant 1 : i32
    %50 = vector.broadcast %c1_i32_27 : i32 to vector<8x1xi32>
    %51 = arith.subi %7, %50 : vector<8x1xi32>
    %52 = vector.broadcast %34 : i32 to vector<8x1xi32>
    %53 = arith.cmpi eq, %52, %51 : vector<8x1xi32>
    %c0_28 = arith.constant 0 : index
    %c0_29 = arith.constant 0 : index
    %54 = vector.load %arg7[%c0_28, %c0_29] : memref<8x32xf32, #tpu.memory_space<vmem>>, vector<8x32xf32>
    %55 = vector.shape_cast %53 : vector<8x1xi1> to vector<8x1xi1>
    %56 = vector.broadcast %55 : vector<8x1xi1> to vector<8x32xi1>
    %57 = arith.select %56, %42, %54 : vector<8x32xi1>, vector<8x32xf32>
    %c0_30 = arith.constant 0 : index
    %c0_31 = arith.constant 0 : index
    %58 = vector.load %arg7[%c0_30, %c0_31] : memref<8x32xf32, #tpu.memory_space<vmem>>, vector<8x32xf32>
    tpu.vector_store %arg7[%c0_30, %c0_31], %57 {strides = array<i32>} : memref<8x32xf32, #tpu.memory_space<vmem>>, vector<8x32xf32>,
    %c2_i32 = arith.constant 2 : i32
    %59 = arith.addi %8, %c2_i32 : i32
    %c0_32 = arith.constant 0 : index
    %c32_33 = arith.constant 32 : index
    %60 = vector.load %arg1[%c0_32, %c32_33] : memref<8x128xf32, #tpu.memory_space<vmem>>, vector<8x16xf32>
    %cst_34 = arith.constant dense<0.000000e+00> : vector<8x32xf32>
    %61 = tpu.matmul %60, %5, %cst_34 {dimension_numbers = #tpu.dot_dimension_numbers<[1], [0], [0], [1], [0, 0, 1, 1], [], []>} : vector<8x16xf32>, vector<16x32xf32>, vector<8x32xf32> -> vector<8x32xf32>
    %62 = vector.broadcast %6 : vector<1x32xf32> to vector<8x32xf32>
    %63 = arith.addf %61, %62 : vector<8x32xf32>
    %64 = arith.truncf %42 : vector<8x32xf32> to vector<8x32xbf16>
    %cst_35 = arith.constant dense<0.000000e+00> : vector<8x32xf32>
    %65 = tpu.matmul %64, %4, %cst_35 {dimension_numbers = #tpu.dot_dimension_numbers<[1], [0], [0], [1], [0, 0, 1, 1], [], []>} : vector<8x32xbf16>, vector<32x32xbf16>, vector<8x32xf32> -> vector<8x32xf32>
    %66 = arith.addf %63, %65 : vector<8x32xf32>
    %67 = math.tanh %66 : vector<8x32xf32>
    %68 = vector.broadcast %59 : i32 to vector<8x1xi32>
    %69 = arith.cmpi slt, %68, %7 : vector<8x1xi32>
    %cst_36 = arith.constant 0.000000e+00 : f32
    %70 = vector.shape_cast %69 : vector<8x1xi1> to vector<8x1xi1>
    %71 = vector.broadcast %70 : vector<8x1xi1> to vector<8x32xi1>
    %72 = vector.broadcast %cst_36 : f32 to vector<8x32xf32>
    %73 = arith.select %71, %67, %72 : vector<8x32xi1>, vector<8x32xf32>
    %c0_37 = arith.constant 0 : index
    %c64 = arith.constant 64 : index
    %74 = vector.load %arg6[%c0_37, %c64] : memref<8x256xf32, #tpu.memory_space<vmem>>, vector<8x32xf32>
    tpu.vector_store %arg6[%c0_37, %c64], %73 {strides = array<i32>} : memref<8x256xf32, #tpu.memory_space<vmem>>, vector<8x32xf32>,
    %c1_i32_38 = arith.constant 1 : i32
    %75 = vector.broadcast %c1_i32_38 : i32 to vector<8x1xi32>
    %76 = arith.subi %7, %75 : vector<8x1xi32>
    %77 = vector.broadcast %59 : i32 to vector<8x1xi32>
    %78 = arith.cmpi eq, %77, %76 : vector<8x1xi32>
    %c0_39 = arith.constant 0 : index
    %c0_40 = arith.constant 0 : index
    %79 = vector.load %arg7[%c0_39, %c0_40] : memref<8x32xf32, #tpu.memory_space<vmem>>, vector<8x32xf32>
    %80 = vector.shape_cast %78 : vector<8x1xi1> to vector<8x1xi1>
    %81 = vector.broadcast %80 : vector<8x1xi1> to vector<8x32xi1>
    %82 = arith.select %81, %67, %79 : vector<8x32xi1>, vector<8x32xf32>
    %c0_41 = arith.constant 0 : index
    %c0_42 = arith.constant 0 : index
    %83 = vector.load %arg7[%c0_41, %c0_42] : memref<8x32xf32, #tpu.memory_space<vmem>>, vector<8x32xf32>
    tpu.vector_store %arg7[%c0_41, %c0_42], %82 {strides = array<i32>} : memref<8x32xf32, #tpu.memory_space<vmem>>, vector<8x32xf32>,
    %c3_i32 = arith.constant 3 : i32
    %84 = arith.addi %8, %c3_i32 : i32
    %c0_43 = arith.constant 0 : index
    %c48 = arith.constant 48 : index
    %85 = vector.load %arg1[%c0_43, %c48] : memref<8x128xf32, #tpu.memory_space<vmem>>, vector<8x16xf32>
    %cst_44 = arith.constant dense<0.000000e+00> : vector<8x32xf32>
    %86 = tpu.matmul %85, %5, %cst_44 {dimension_numbers = #tpu.dot_dimension_numbers<[1], [0], [0], [1], [0, 0, 1, 1], [], []>} : vector<8x16xf32>, vector<16x32xf32>, vector<8x32xf32> -> vector<8x32xf32>
    %87 = vector.broadcast %6 : vector<1x32xf32> to vector<8x32xf32>
    %88 = arith.addf %86, %87 : vector<8x32xf32>
    %89 = arith.truncf %67 : vector<8x32xf32> to vector<8x32xbf16>
    %cst_45 = arith.constant dense<0.000000e+00> : vector<8x32xf32>
    %90 = tpu.matmul %89, %4, %cst_45 {dimension_numbers = #tpu.dot_dimension_numbers<[1], [0], [0], [1], [0, 0, 1, 1], [], []>} : vector<8x32xbf16>, vector<32x32xbf16>, vector<8x32xf32> -> vector<8x32xf32>
    %91 = arith.addf %88, %90 : vector<8x32xf32>
    %92 = math.tanh %91 : vector<8x32xf32>
    %93 = vector.broadcast %84 : i32 to vector<8x1xi32>
    %94 = arith.cmpi slt, %93, %7 : vector<8x1xi32>
    %cst_46 = arith.constant 0.000000e+00 : f32
    %95 = vector.shape_cast %94 : vector<8x1xi1> to vector<8x1xi1>
    %96 = vector.broadcast %95 : vector<8x1xi1> to vector<8x32xi1>
    %97 = vector.broadcast %cst_46 : f32 to vector<8x32xf32>
    %98 = arith.select %96, %92, %97 : vector<8x32xi1>, vector<8x32xf32>
    %c0_47 = arith.constant 0 : index
    %c96 = arith.constant 96 : index
    %99 = vector.load %arg6[%c0_47, %c96] : memref<8x256xf32, #tpu.memory_space<vmem>>, vector<8x32xf32>
    tpu.vector_store %arg6[%c0_47, %c96], %98 {strides = array<i32>} : memref<8x256xf32, #tpu.memory_space<vmem>>, vector<8x32xf32>,
    %c1_i32_48 = arith.constant 1 : i32
    %100 = vector.broadcast %c1_i32_48 : i32 to vector<8x1xi32>
    %101 = arith.subi %7, %100 : vector<8x1xi32>
    %102 = vector.broadcast %84 : i32 to vector<8x1xi32>
    %103 = arith.cmpi eq, %102, %101 : vector<8x1xi32>
    %c0_49 = arith.constant 0 : index
    %c0_50 = arith.constant 0 : index
    %104 = vector.load %arg7[%c0_49, %c0_50] : memref<8x32xf32, #tpu.memory_space<vmem>>, vector<8x32xf32>
    %105 = vector.shape_cast %103 : vector<8x1xi1> to vector<8x1xi1>
    %106 = vector.broadcast %105 : vector<8x1xi1> to vector<8x32xi1>
    %107 = arith.select %106, %92, %104 : vector<8x32xi1>, vector<8x32xf32>
    %c0_51 = arith.constant 0 : index
    %c0_52 = arith.constant 0 : index
    %108 = vector.load %arg7[%c0_51, %c0_52] : memref<8x32xf32, #tpu.memory_space<vmem>>, vector<8x32xf32>
    tpu.vector_store %arg7[%c0_51, %c0_52], %107 {strides = array<i32>} : memref<8x32xf32, #tpu.memory_space<vmem>>, vector<8x32xf32>,
    %c4_i32 = arith.constant 4 : i32
    %109 = arith.addi %8, %c4_i32 : i32
    %c0_53 = arith.constant 0 : index
    %c64_54 = arith.constant 64 : index
    %110 = vector.load %arg1[%c0_53, %c64_54] : memref<8x128xf32, #tpu.memory_space<vmem>>, vector<8x16xf32>
    %cst_55 = arith.constant dense<0.000000e+00> : vector<8x32xf32>
    %111 = tpu.matmul %110, %5, %cst_55 {dimension_numbers = #tpu.dot_dimension_numbers<[1], [0], [0], [1], [0, 0, 1, 1], [], []>} : vector<8x16xf32>, vector<16x32xf32>, vector<8x32xf32> -> vector<8x32xf32>
    %112 = vector.broadcast %6 : vector<1x32xf32> to vector<8x32xf32>
    %113 = arith.addf %111, %112 : vector<8x32xf32>
    %114 = arith.truncf %92 : vector<8x32xf32> to vector<8x32xbf16>
    %cst_56 = arith.constant dense<0.000000e+00> : vector<8x32xf32>
    %115 = tpu.matmul %114, %4, %cst_56 {dimension_numbers = #tpu.dot_dimension_numbers<[1], [0], [0], [1], [0, 0, 1, 1], [], []>} : vector<8x32xbf16>, vector<32x32xbf16>, vector<8x32xf32> -> vector<8x32xf32>
    %116 = arith.addf %113, %115 : vector<8x32xf32>
    %117 = math.tanh %116 : vector<8x32xf32>
    %118 = vector.broadcast %109 : i32 to vector<8x1xi32>
    %119 = arith.cmpi slt, %118, %7 : vector<8x1xi32>
    %cst_57 = arith.constant 0.000000e+00 : f32
    %120 = vector.shape_cast %119 : vector<8x1xi1> to vector<8x1xi1>
    %121 = vector.broadcast %120 : vector<8x1xi1> to vector<8x32xi1>
    %122 = vector.broadcast %cst_57 : f32 to vector<8x32xf32>
    %123 = arith.select %121, %117, %122 : vector<8x32xi1>, vector<8x32xf32>
    %c0_58 = arith.constant 0 : index
    %c128 = arith.constant 128 : index
    %124 = vector.load %arg6[%c0_58, %c128] : memref<8x256xf32, #tpu.memory_space<vmem>>, vector<8x32xf32>
    tpu.vector_store %arg6[%c0_58, %c128], %123 {strides = array<i32>} : memref<8x256xf32, #tpu.memory_space<vmem>>, vector<8x32xf32>,
    %c1_i32_59 = arith.constant 1 : i32
    %125 = vector.broadcast %c1_i32_59 : i32 to vector<8x1xi32>
    %126 = arith.subi %7, %125 : vector<8x1xi32>
    %127 = vector.broadcast %109 : i32 to vector<8x1xi32>
    %128 = arith.cmpi eq, %127, %126 : vector<8x1xi32>
    %c0_60 = arith.constant 0 : index
    %c0_61 = arith.constant 0 : index
    %129 = vector.load %arg7[%c0_60, %c0_61] : memref<8x32xf32, #tpu.memory_space<vmem>>, vector<8x32xf32>
    %130 = vector.shape_cast %128 : vector<8x1xi1> to vector<8x1xi1>
    %131 = vector.broadcast %130 : vector<8x1xi1> to vector<8x32xi1>
    %132 = arith.select %131, %117, %129 : vector<8x32xi1>, vector<8x32xf32>
    %c0_62 = arith.constant 0 : index
    %c0_63 = arith.constant 0 : index
    %133 = vector.load %arg7[%c0_62, %c0_63] : memref<8x32xf32, #tpu.memory_space<vmem>>, vector<8x32xf32>
    tpu.vector_store %arg7[%c0_62, %c0_63], %132 {strides = array<i32>} : memref<8x32xf32, #tpu.memory_space<vmem>>, vector<8x32xf32>,
    %c5_i32 = arith.constant 5 : i32
    %134 = arith.addi %8, %c5_i32 : i32
    %c0_64 = arith.constant 0 : index
    %c80 = arith.constant 80 : index
    %135 = vector.load %arg1[%c0_64, %c80] : memref<8x128xf32, #tpu.memory_space<vmem>>, vector<8x16xf32>
    %cst_65 = arith.constant dense<0.000000e+00> : vector<8x32xf32>
    %136 = tpu.matmul %135, %5, %cst_65 {dimension_numbers = #tpu.dot_dimension_numbers<[1], [0], [0], [1], [0, 0, 1, 1], [], []>} : vector<8x16xf32>, vector<16x32xf32>, vector<8x32xf32> -> vector<8x32xf32>
    %137 = vector.broadcast %6 : vector<1x32xf32> to vector<8x32xf32>
    %138 = arith.addf %136, %137 : vector<8x32xf32>
    %139 = arith.truncf %117 : vector<8x32xf32> to vector<8x32xbf16>
    %cst_66 = arith.constant dense<0.000000e+00> : vector<8x32xf32>
    %140 = tpu.matmul %139, %4, %cst_66 {dimension_numbers = #tpu.dot_dimension_numbers<[1], [0], [0], [1], [0, 0, 1, 1], [], []>} : vector<8x32xbf16>, vector<32x32xbf16>, vector<8x32xf32> -> vector<8x32xf32>
    %141 = arith.addf %138, %140 : vector<8x32xf32>
    %142 = math.tanh %141 : vector<8x32xf32>
    %143 = vector.broadcast %134 : i32 to vector<8x1xi32>
    %144 = arith.cmpi slt, %143, %7 : vector<8x1xi32>
    %cst_67 = arith.constant 0.000000e+00 : f32
    %145 = vector.shape_cast %144 : vector<8x1xi1> to vector<8x1xi1>
    %146 = vector.broadcast %145 : vector<8x1xi1> to vector<8x32xi1>
    %147 = vector.broadcast %cst_67 : f32 to vector<8x32xf32>
    %148 = arith.select %146, %142, %147 : vector<8x32xi1>, vector<8x32xf32>
    %c0_68 = arith.constant 0 : index
    %c160 = arith.constant 160 : index
    %149 = vector.load %arg6[%c0_68, %c160] : memref<8x256xf32, #tpu.memory_space<vmem>>, vector<8x32xf32>
    tpu.vector_store %arg6[%c0_68, %c160], %148 {strides = array<i32>} : memref<8x256xf32, #tpu.memory_space<vmem>>, vector<8x32xf32>,
    %c1_i32_69 = arith.constant 1 : i32
    %150 = vector.broadcast %c1_i32_69 : i32 to vector<8x1xi32>
    %151 = arith.subi %7, %150 : vector<8x1xi32>
    %152 = vector.broadcast %134 : i32 to vector<8x1xi32>
    %153 = arith.cmpi eq, %152, %151 : vector<8x1xi32>
    %c0_70 = arith.constant 0 : index
    %c0_71 = arith.constant 0 : index
    %154 = vector.load %arg7[%c0_70, %c0_71] : memref<8x32xf32, #tpu.memory_space<vmem>>, vector<8x32xf32>
    %155 = vector.shape_cast %153 : vector<8x1xi1> to vector<8x1xi1>
    %156 = vector.broadcast %155 : vector<8x1xi1> to vector<8x32xi1>
    %157 = arith.select %156, %142, %154 : vector<8x32xi1>, vector<8x32xf32>
    %c0_72 = arith.constant 0 : index
    %c0_73 = arith.constant 0 : index
    %158 = vector.load %arg7[%c0_72, %c0_73] : memref<8x32xf32, #tpu.memory_space<vmem>>, vector<8x32xf32>
    tpu.vector_store %arg7[%c0_72, %c0_73], %157 {strides = array<i32>} : memref<8x32xf32, #tpu.memory_space<vmem>>, vector<8x32xf32>,
    %c6_i32 = arith.constant 6 : i32
    %159 = arith.addi %8, %c6_i32 : i32
    %c0_74 = arith.constant 0 : index
    %c96_75 = arith.constant 96 : index
    %160 = vector.load %arg1[%c0_74, %c96_75] : memref<8x128xf32, #tpu.memory_space<vmem>>, vector<8x16xf32>
    %cst_76 = arith.constant dense<0.000000e+00> : vector<8x32xf32>
    %161 = tpu.matmul %160, %5, %cst_76 {dimension_numbers = #tpu.dot_dimension_numbers<[1], [0], [0], [1], [0, 0, 1, 1], [], []>} : vector<8x16xf32>, vector<16x32xf32>, vector<8x32xf32> -> vector<8x32xf32>
    %162 = vector.broadcast %6 : vector<1x32xf32> to vector<8x32xf32>
    %163 = arith.addf %161, %162 : vector<8x32xf32>
    %164 = arith.truncf %142 : vector<8x32xf32> to vector<8x32xbf16>
    %cst_77 = arith.constant dense<0.000000e+00> : vector<8x32xf32>
    %165 = tpu.matmul %164, %4, %cst_77 {dimension_numbers = #tpu.dot_dimension_numbers<[1], [0], [0], [1], [0, 0, 1, 1], [], []>} : vector<8x32xbf16>, vector<32x32xbf16>, vector<8x32xf32> -> vector<8x32xf32>
    %166 = arith.addf %163, %165 : vector<8x32xf32>
    %167 = math.tanh %166 : vector<8x32xf32>
    %168 = vector.broadcast %159 : i32 to vector<8x1xi32>
    %169 = arith.cmpi slt, %168, %7 : vector<8x1xi32>
    %cst_78 = arith.constant 0.000000e+00 : f32
    %170 = vector.shape_cast %169 : vector<8x1xi1> to vector<8x1xi1>
    %171 = vector.broadcast %170 : vector<8x1xi1> to vector<8x32xi1>
    %172 = vector.broadcast %cst_78 : f32 to vector<8x32xf32>
    %173 = arith.select %171, %167, %172 : vector<8x32xi1>, vector<8x32xf32>
    %c0_79 = arith.constant 0 : index
    %c192 = arith.constant 192 : index
    %174 = vector.load %arg6[%c0_79, %c192] : memref<8x256xf32, #tpu.memory_space<vmem>>, vector<8x32xf32>
    tpu.vector_store %arg6[%c0_79, %c192], %173 {strides = array<i32>} : memref<8x256xf32, #tpu.memory_space<vmem>>, vector<8x32xf32>,
    %c1_i32_80 = arith.constant 1 : i32
    %175 = vector.broadcast %c1_i32_80 : i32 to vector<8x1xi32>
    %176 = arith.subi %7, %175 : vector<8x1xi32>
    %177 = vector.broadcast %159 : i32 to vector<8x1xi32>
    %178 = arith.cmpi eq, %177, %176 : vector<8x1xi32>
    %c0_81 = arith.constant 0 : index
    %c0_82 = arith.constant 0 : index
    %179 = vector.load %arg7[%c0_81, %c0_82] : memref<8x32xf32, #tpu.memory_space<vmem>>, vector<8x32xf32>
    %180 = vector.shape_cast %178 : vector<8x1xi1> to vector<8x1xi1>
    %181 = vector.broadcast %180 : vector<8x1xi1> to vector<8x32xi1>
    %182 = arith.select %181, %167, %179 : vector<8x32xi1>, vector<8x32xf32>
    %c0_83 = arith.constant 0 : index
    %c0_84 = arith.constant 0 : index
    %183 = vector.load %arg7[%c0_83, %c0_84] : memref<8x32xf32, #tpu.memory_space<vmem>>, vector<8x32xf32>
    tpu.vector_store %arg7[%c0_83, %c0_84], %182 {strides = array<i32>} : memref<8x32xf32, #tpu.memory_space<vmem>>, vector<8x32xf32>,
    %c7_i32 = arith.constant 7 : i32
    %184 = arith.addi %8, %c7_i32 : i32
    %c0_85 = arith.constant 0 : index
    %c112 = arith.constant 112 : index
    %185 = vector.load %arg1[%c0_85, %c112] : memref<8x128xf32, #tpu.memory_space<vmem>>, vector<8x16xf32>
    %cst_86 = arith.constant dense<0.000000e+00> : vector<8x32xf32>
    %186 = tpu.matmul %185, %5, %cst_86 {dimension_numbers = #tpu.dot_dimension_numbers<[1], [0], [0], [1], [0, 0, 1, 1], [], []>} : vector<8x16xf32>, vector<16x32xf32>, vector<8x32xf32> -> vector<8x32xf32>
    %187 = vector.broadcast %6 : vector<1x32xf32> to vector<8x32xf32>
    %188 = arith.addf %186, %187 : vector<8x32xf32>
    %189 = arith.truncf %167 : vector<8x32xf32> to vector<8x32xbf16>
    %cst_87 = arith.constant dense<0.000000e+00> : vector<8x32xf32>
    %190 = tpu.matmul %189, %4, %cst_87 {dimension_numbers = #tpu.dot_dimension_numbers<[1], [0], [0], [1], [0, 0, 1, 1], [], []>} : vector<8x32xbf16>, vector<32x32xbf16>, vector<8x32xf32> -> vector<8x32xf32>
    %191 = arith.addf %188, %190 : vector<8x32xf32>
    %192 = math.tanh %191 : vector<8x32xf32>
    %193 = vector.broadcast %184 : i32 to vector<8x1xi32>
    %194 = arith.cmpi slt, %193, %7 : vector<8x1xi32>
    %cst_88 = arith.constant 0.000000e+00 : f32
    %195 = vector.shape_cast %194 : vector<8x1xi1> to vector<8x1xi1>
    %196 = vector.broadcast %195 : vector<8x1xi1> to vector<8x32xi1>
    %197 = vector.broadcast %cst_88 : f32 to vector<8x32xf32>
    %198 = arith.select %196, %192, %197 : vector<8x32xi1>, vector<8x32xf32>
    %c0_89 = arith.constant 0 : index
    %c224 = arith.constant 224 : index
    %199 = vector.load %arg6[%c0_89, %c224] : memref<8x256xf32, #tpu.memory_space<vmem>>, vector<8x32xf32>
    tpu.vector_store %arg6[%c0_89, %c224], %198 {strides = array<i32>} : memref<8x256xf32, #tpu.memory_space<vmem>>, vector<8x32xf32>,
    %c1_i32_90 = arith.constant 1 : i32
    %200 = vector.broadcast %c1_i32_90 : i32 to vector<8x1xi32>
    %201 = arith.subi %7, %200 : vector<8x1xi32>
    %202 = vector.broadcast %184 : i32 to vector<8x1xi32>
    %203 = arith.cmpi eq, %202, %201 : vector<8x1xi32>
    %c0_91 = arith.constant 0 : index
    %c0_92 = arith.constant 0 : index
    %204 = vector.load %arg7[%c0_91, %c0_92] : memref<8x32xf32, #tpu.memory_space<vmem>>, vector<8x32xf32>
    %205 = vector.shape_cast %203 : vector<8x1xi1> to vector<8x1xi1>
    %206 = vector.broadcast %205 : vector<8x1xi1> to vector<8x32xi1>
    %207 = arith.select %206, %192, %204 : vector<8x32xi1>, vector<8x32xf32>
    %c0_93 = arith.constant 0 : index
    %c0_94 = arith.constant 0 : index
    %208 = vector.load %arg7[%c0_93, %c0_94] : memref<8x32xf32, #tpu.memory_space<vmem>>, vector<8x32xf32>
    tpu.vector_store %arg7[%c0_93, %c0_94], %207 {strides = array<i32>} : memref<8x32xf32, #tpu.memory_space<vmem>>, vector<8x32xf32>,
    %c0_95 = arith.constant 0 : index
    %c0_96 = arith.constant 0 : index
    %209 = vector.load %arg8[%c0_95, %c0_96] : memref<8x32xf32, #tpu.memory_space<vmem>>, vector<8x32xf32>
    tpu.vector_store %arg8[%c0_95, %c0_96], %192 {strides = array<i32>} : memref<8x32xf32, #tpu.memory_space<vmem>>, vector<8x32xf32>,
    return
  }
  func.func @transform_0(%arg0: i32) -> (i32, i32) {
    %c0_i32 = arith.constant 0 : i32
    %c0_i32_0 = arith.constant 0 : i32
    return %c0_i32, %arg0 : i32, i32
  }
  func.func @transform_1(%arg0: i32) -> (i32, i32) {
    %c0_i32 = arith.constant 0 : i32
    %c0_i32_0 = arith.constant 0 : i32
    %c0_i32_1 = arith.constant 0 : i32
    return %c0_i32, %c0_i32_0 : i32, i32
  }
  func.func @transform_2(%arg0: i32) -> (i32, i32) {
    %c0_i32 = arith.constant 0 : i32
    %c0_i32_0 = arith.constant 0 : i32
    %c0_i32_1 = arith.constant 0 : i32
    return %c0_i32, %c0_i32_0 : i32, i32
  }
  func.func @transform_3(%arg0: i32) -> (i32, i32) {
    %c0_i32 = arith.constant 0 : i32
    %c0_i32_0 = arith.constant 0 : i32
    %c0_i32_1 = arith.constant 0 : i32
    return %c0_i32, %c0_i32_0 : i32, i32
  }
  func.func @transform_4(%arg0: i32) -> (i32, i32) {
    %c0_i32 = arith.constant 0 : i32
    %c0_i32_0 = arith.constant 0 : i32
    %c0_i32_1 = arith.constant 0 : i32
    return %c0_i32, %c0_i32_0 : i32, i32
  }
  func.func @transform_5(%arg0: i32) -> (i32, i32) {
    %c0_i32 = arith.constant 0 : i32
    %c0_i32_0 = arith.constant 0 : i32
    return %c0_i32, %arg0 : i32, i32
  }
  func.func @transform_6(%arg0: i32) -> (i32, i32) {
    %c0_i32 = arith.constant 0 : i32
    %c0_i32_0 = arith.constant 0 : i32
    %c0_i32_1 = arith.constant 0 : i32
    return %c0_i32, %c0_i32_0 : i32, i32
  }
}

</mosaic_0001>

<llo_original>
// kernel: tpu_custom_call.1
$region0: #{tpu_custom_call.1}
  #allocation0 [shape = 'u32[]', space=smem, size = 0x4, offset = 0x4, fixed_abs, tag = 'smem constant byte address 0x4 - core index']
  #allocation1 [shape = 'u32[72,128]{1,0:T(1,128)}', space=vmem, size = 0x9000, scoped, tag = 'internal scratch']
  #allocation2 [shape = 'f32[8,32]{1,0:T(8,128)}', space=vmem, size = 0x1000, scoped, tag = 'scratch operand']
  %s0 = inlined_call_operand.vmem [shape: f32[8,128], index: 0, kind: input, shape index: {}]
  %s1 = inlined_call_operand.vmem [shape: s32[8,1], index: 1, kind: input, shape index: {}]
  %s2 = inlined_call_operand.hbm [shape: f32[16,32], index: 2, kind: input, shape index: {}]
  %s3 = inlined_call_operand.vmem [shape: f32[1,32], index: 3, kind: input, shape index: {}]
  %s4 = inlined_call_operand.hbm [shape: bf16[32,32], index: 4, kind: input, shape index: {}]
  %s5 = inlined_call_operand.hbm [shape: f32[8,256], index: 5, kind: output, shape index: {0}]
  %s6 = inlined_call_operand.hbm [shape: f32[8,32], index: 6, kind: output, shape index: {1}]
  %7 = xla_tuple %s5, %s6
  %s8 = sld [smem:[#allocation0]]
  $region50: #{tpu_custom_call.1} parent=0
    _
  %s10 = ssub.s32 1, %s8
  %s11 = scalar_select 0, %s10, %s8
  $region1: #{tpu_custom_call.1} parent=0
    #allocation3 [shape = 'u8[8192]{0}', space=vmem, size = 0x2000, scoped, tag = 'input window, operand 2, single buffered']
    #allocation4 [shape = 's32[1]{0}', space=sflag, size = 0x4, scoped, tag = 'scoped memory for tpu_custom_call.1']
    #allocation5 [shape = 's32[1]{0}', space=sflag, size = 0x4, scoped, tag = 'scoped memory for tpu_custom_call.1']
    #allocation6 [shape = 'u8[8192]{0}', space=vmem, size = 0x2000, scoped, tag = 'input window, operand 4, single buffered']
    #allocation7 [shape = 's32[1]{0}', space=sflag, size = 0x4, scoped, tag = 'scoped memory for tpu_custom_call.1']
    #allocation8 [shape = 'u8[8192]{0}', space=vmem, size = 0x2000, scoped, tag = 'output window, operand 0, single buffered']
    #allocation9 [shape = 'u8[4096]{0}', space=vmem, size = 0x1000, scoped, tag = 'output window, operand 1, single buffered']
    #allocation10 [shape = 's32[1]{0}', space=sflag, size = 0x4, scoped, tag = 'scoped memory for tpu_custom_call.1']
    %12 = vsyncpa [#allocation4], 0
    %13 = vsyncpa [#allocation7], 0
    %14 = vsyncpa [#allocation5], 0
    %15 = vsyncpa [#allocation10], 0
    // Predicated region
    $region2: #{tpu_custom_call.1} parent=1 // pred_check
      _
    $region3: #{tpu_custom_call.1} parent=1 // pred_check_branch
      %17 = sbr.rel (0) target = $region5
    $region4: #{tpu_custom_call.1} parent=1 // pred_region
      _
    $region5: #{tpu_custom_call.1} parent=1 // pred_fallthru
      _
    // Predicated region
    $region6: #{tpu_custom_call.1} parent=1 // pred_check
      _
    $region7: #{tpu_custom_call.1} parent=1 // pred_check_branch
      %19 = sbr.rel (0) target = $region9
    $region8: #{tpu_custom_call.1} parent=1 // pred_region
      _
    $region9: #{tpu_custom_call.1} parent=1 // pred_fallthru
      _
    // Predicated region
    $region10: #{tpu_custom_call.1} parent=1 // pred_check
      _
    $region11: #{tpu_custom_call.1} parent=1 // pred_check_branch
      %21 = sbr.rel (0) target = $region13
    $region12: #{tpu_custom_call.1} parent=1 // pred_region
      %23 = vsyncadd [#allocation4], 0
      %s24 = sshll.u32 %s2, 4
      %s25 = int_to_ptr.hbm [resolvable:$true] %s24
      %s26 = sshll.u32 [#allocation3], 4
      %s27 = int_to_ptr.vmem [resolvable:$true] %s26
      %32 = dma.hbm_to_vmem [thread:$0]  %s25, 256, %s27, [#allocation4], 128, 128, 8
    $region13: #{tpu_custom_call.1} parent=1 // pred_fallthru
      _
    // Predicated region
    $region14: #{tpu_custom_call.1} parent=1 // pred_check
      _
    $region15: #{tpu_custom_call.1} parent=1 // pred_check_branch
      %34 = sbr.rel (0) target = $region17
    $region16: #{tpu_custom_call.1} parent=1 // pred_region
      _
    $region17: #{tpu_custom_call.1} parent=1 // pred_fallthru
      _
    // Predicated region
    $region18: #{tpu_custom_call.1} parent=1 // pred_check
      _
    $region19: #{tpu_custom_call.1} parent=1 // pred_check_branch
      %36 = sbr.rel (0) target = $region21
    $region20: #{tpu_custom_call.1} parent=1 // pred_region
      %38 = vsyncadd [#allocation7], 0
      %s39 = sshll.u32 %s4, 4
      %s40 = int_to_ptr.hbm [resolvable:$true] %s39
      %s41 = sshll.u32 [#allocation6], 4
      %s42 = int_to_ptr.vmem [resolvable:$true] %s41
      %47 = dma.hbm_to_vmem [thread:$0]  %s40, 256, %s42, [#allocation7], 64, 64, 4
    $region21: #{tpu_custom_call.1} parent=1 // pred_fallthru
      _
    // Predicated region
    $region22: #{tpu_custom_call.1} parent=1 // pred_check
      _
    $region23: #{tpu_custom_call.1} parent=1 // pred_check_branch
      %49 = sbr.rel (0) target = $region25
    $region24: #{tpu_custom_call.1} parent=1 // pred_region
      %51 = dma.done [#allocation4], 256
    $region25: #{tpu_custom_call.1} parent=1 // pred_fallthru
      _
    // Predicated region
    $region26: #{tpu_custom_call.1} parent=1 // pred_check
      _
    $region27: #{tpu_custom_call.1} parent=1 // pred_check_branch
      %53 = sbr.rel (0) target = $region29
    $region28: #{tpu_custom_call.1} parent=1 // pred_region
      %55 = dma.done [#allocation7], 256
    $region29: #{tpu_custom_call.1} parent=1 // pred_fallthru
      _
    %p57 = scmp.eq.s32.totalorder 0, 0
    // Predicated region
    $region30: #{tpu_custom_call.1} parent=1 // pred_check
      %p58 = pneg %p57
    $region31: #{tpu_custom_call.1} parent=1 // pred_check_branch
      %60 = sbr.rel (%p58) target = $region33
    $region32: #{tpu_custom_call.1} parent=1 // pred_region
      %vm61 = vcmask 261120
      %62 = vst.msk [vmem:[#allocation2] sm:$0xff] %vm61, 0.0
      %63 = vst.msk [vmem:[#allocation9] sm:$0xff] %vm61, 0.0
    $region33: #{tpu_custom_call.1} parent=1 // pred_fallthru
      _
    %v64 = vld [vmem:[#allocation2] sm:$0xff]
    %v65 = vld [vmem:[#allocation6] sm:$0xf]
    %v66 = vld [vmem:[#allocation6 + $0x4] sm:$0xf]
    %v67 = vld [vmem:[#allocation6 + $0x8] sm:$0xf]
    %v68 = vld [vmem:[#allocation6 + $0xc] sm:$0xf]
    %v69 = vld [vmem:[#allocation3] sm:$0xff]
    %v70 = vld [vmem:[#allocation3 + $0x8] sm:$0xff]
    %v71 = vld [vmem:[%s3] sm:$0x1]
    %v72 = vld [vmem:[%s1] sm:$0xff]
    %s73 = smul.u32 0, 8
    %v74 = vld [vmem:[%s0] sm:$0xff]
    %v76 = vperm.slane %v71, 0
    %vm78 = vcmask 130048
    %v80 = vsel %vm78, %v74, 0
    %82 = vmatpush.msra.mxu0 0.0
    %83 = vmatpush.msra.mxu0 0.0
    %84 = vmatpush.msra.mxu0 0.0
    %85 = vmatpush.msra.mxu0 0.0
    %86 = vmatpush.msra.mxu0 0.0
    %87 = vmatpush.msra.mxu0 0.0
    %88 = vmatpush.msra.mxu0 0.0
    %89 = vmatpush.msra.mxu0 0.0
    %90 = vmatpush.msra.mxu0 0.0
    %91 = vmatpush.msra.mxu0 0.0
    %92 = vmatpush.msra.mxu0 0.0
    %93 = vmatpush.msra.mxu0 0.0
    %94 = vmatpush.msra.mxu0 0.0
    %95 = vmatpush.msra.mxu0 0.0
    %96 = vmatpush.msra.mxu0 %v70
    %97 = vmatpush.msra.mxu0 %v69
    %98 = vmatmul.f32.gmra.mxu0 %v80
    %v99 = vpop.f32.mrf.mxu0
    %v100 = vadd.f32 %v76, %v99
    %101 = vdwg.mxu0
    %v102 = vpack.c.bf16 %v64, %v64
    %v107 = vunpack.c.l.b16 %v65
    %v108 = vunpack.c.l.b16 %v66
    %v109 = vunpack.c.l.b16 %v67
    %v110 = vunpack.c.l.b16 %v68
    %v111 = vpack.c.b16 %v108, %v107
    %v112 = vpack.c.b16 %v110, %v109
    %vm115 = vcmask 261120
    %v117 = vsel %vm115, %v102, 0
    %119 = vmatpush.bf16.msra.mxu0 0
    %120 = vmatpush.bf16.msra.mxu0 0
    %121 = vmatpush.bf16.msra.mxu0 0
    %122 = vmatpush.bf16.msra.mxu0 0
    %123 = vmatpush.bf16.msra.mxu0 0
    %124 = vmatpush.bf16.msra.mxu0 0
    %125 = vmatpush.bf16.msra.mxu0 %v112
    %126 = vmatpush.bf16.msra.mxu0 %v111
    %127 = vmatmul.bf16.gmra.mxu0 %v117
    %v128 = vpop.f32.mrf.mxu0
    %v129 = vadd.f32 0.0, %v128
    %v130 = vpop.f32.mrf.mxu0
    %131 = vdwg.mxu0
    %v132 = vadd.f32 %v100, %v129
    %v133 = vtanh.pop %v132
    %v134 = vstv %s73
    %vm135 = vcmp.lt.s32.totalorder %v134, %v72
    %v136 = vsel %vm135, 1, 0
    %137 = vset.pattern.permute.xlu0 0
    %138 = vperm.xlu0 %137, %v136
    %v139 = vpop.permute.xlu0 %138
    %vm140 = vcmp.eq.s32.totalorder %v139, 1
    %v141 = vsel %vm140, %v133, 0.0
    %142 = vst.msk [vmem:[#allocation8] sm:$0xff] %vm115, %v141
    %v143 = vsub.s32 %v72, 1
    %vm144 = vcmp.eq.s32.totalorder %v134, %v143
    %v145 = vld [vmem:[#allocation9] sm:$0xff]
    %v146 = vsel %vm144, 1, 0
    %147 = vset.pattern.permute.xlu0 0
    %148 = vperm.xlu0 %147, %v146
    %v149 = vpop.permute.xlu0 %148
    %vm150 = vcmp.eq.s32.totalorder %v149, 1
    %v151 = vsel %vm150, %v133, %v145
    %152 = vst.msk [vmem:[#allocation9] sm:$0xff] %vm115, %v151
    %s153 = sadd.s32 %s73, 1
    %v154 = vld [vmem:[%s0] sm:$0xff]
    %156 = vrot.lane.b32.xlu0 %v154, 112
    %v157 = vpop.permute.xlu0 %156
    %v158 = vsel %vm78, %v157, 0
    %160 = vmatpush.msra.mxu0 0.0
    %161 = vmatpush.msra.mxu0 0.0
    %162 = vmatpush.msra.mxu0 0.0
    %163 = vmatpush.msra.mxu0 0.0
    %164 = vmatpush.msra.mxu0 0.0
    %165 = vmatpush.msra.mxu0 0.0
    %166 = vmatpush.msra.mxu0 0.0
    %167 = vmatpush.msra.mxu0 0.0
    %168 = vmatpush.msra.mxu0 0.0
    %169 = vmatpush.msra.mxu0 0.0
    %170 = vmatpush.msra.mxu0 0.0
    %171 = vmatpush.msra.mxu0 0.0
    %172 = vmatpush.msra.mxu0 0.0
    %173 = vmatpush.msra.mxu0 0.0
    %174 = vmatpush.msra.mxu0 %v70
    %175 = vmatpush.msra.mxu0 %v69
    %176 = vmatmul.f32.gmra.mxu0 %v158
    %v177 = vpop.f32.mrf.mxu0
    %v178 = vadd.f32 %v76, %v177
    %179 = vdwg.mxu0
    %v180 = vpack.c.bf16 %v133, %v133
    %v182 = vsel %vm115, %v180, 0
    %184 = vmatpush.bf16.msra.mxu0 0
    %185 = vmatpush.bf16.msra.mxu0 0
    %186 = vmatpush.bf16.msra.mxu0 0
    %187 = vmatpush.bf16.msra.mxu0 0
    %188 = vmatpush.bf16.msra.mxu0 0
    %189 = vmatpush.bf16.msra.mxu0 0
    %190 = vmatpush.bf16.msra.mxu0 %v112
    %191 = vmatpush.bf16.msra.mxu0 %v111
    %192 = vmatmul.bf16.gmra.mxu0 %v182
    %v193 = vpop.f32.mrf.mxu0
    %v194 = vadd.f32 0.0, %v193
    %v195 = vpop.f32.mrf.mxu0
    %196 = vdwg.mxu0
    %v197 = vadd.f32 %v178, %v194
    %v198 = vtanh.pop %v197
    %v199 = vstv %s153
    %vm200 = vcmp.lt.s32.totalorder %v199, %v72
    %v201 = vsel %vm200, 1, 0
    %202 = vset.pattern.permute.xlu0 0
    %203 = vperm.xlu0 %202, %v201
    %v204 = vpop.permute.xlu0 %203
    %vm205 = vcmp.eq.s32.totalorder %v204, 1
    %v206 = vsel %vm205, %v198, 0.0
    %208 = vrot.lane.b32.xlu0 %v206, 32
    %v209 = vpop.permute.xlu0 %208
    %vm211 = vcmask 523520
    %212 = vst.msk [vmem:[#allocation8] sm:$0xff] %vm211, %v209
    %vm213 = vcmp.eq.s32.totalorder %v199, %v143
    %v214 = vld [vmem:[#allocation9] sm:$0xff]
    %v215 = vsel %vm213, 1, 0
    %216 = vset.pattern.permute.xlu0 0
    %217 = vperm.xlu0 %216, %v215
    %v218 = vpop.permute.xlu0 %217
    %vm219 = vcmp.eq.s32.totalorder %v218, 1
    %v220 = vsel %vm219, %v198, %v214
    %221 = vst.msk [vmem:[#allocation9] sm:$0xff] %vm115, %v220
    %s222 = sadd.s32 %s73, 2
    %v223 = vld [vmem:[%s0] sm:$0xff]
    %225 = vrot.lane.b32.xlu0 %v223, 96
    %v226 = vpop.permute.xlu0 %225
    %v227 = vsel %vm78, %v226, 0
    %229 = vmatpush.msra.mxu0 0.0
    %230 = vmatpush.msra.mxu0 0.0
    %231 = vmatpush.msra.mxu0 0.0
    %232 = vmatpush.msra.mxu0 0.0
    %233 = vmatpush.msra.mxu0 0.0
    %234 = vmatpush.msra.mxu0 0.0
    %235 = vmatpush.msra.mxu0 0.0
    %236 = vmatpush.msra.mxu0 0.0
    %237 = vmatpush.msra.mxu0 0.0
    %238 = vmatpush.msra.mxu0 0.0
    %239 = vmatpush.msra.mxu0 0.0
    %240 = vmatpush.msra.mxu0 0.0
    %241 = vmatpush.msra.mxu0 0.0
    %242 = vmatpush.msra.mxu0 0.0
    %243 = vmatpush.msra.mxu0 %v70
    %244 = vmatpush.msra.mxu0 %v69
    %245 = vmatmul.f32.gmra.mxu0 %v227
    %v246 = vpop.f32.mrf.mxu0
    %v247 = vadd.f32 %v76, %v246
    %248 = vdwg.mxu0
    %v249 = vpack.c.bf16 %v198, %v198
    %v251 = vsel %vm115, %v249, 0
    %253 = vmatpush.bf16.msra.mxu0 0
    %254 = vmatpush.bf16.msra.mxu0 0
    %255 = vmatpush.bf16.msra.mxu0 0
    %256 = vmatpush.bf16.msra.mxu0 0
    %257 = vmatpush.bf16.msra.mxu0 0
    %258 = vmatpush.bf16.msra.mxu0 0
    %259 = vmatpush.bf16.msra.mxu0 %v112
    %260 = vmatpush.bf16.msra.mxu0 %v111
    %261 = vmatmul.bf16.gmra.mxu0 %v251
    %v262 = vpop.f32.mrf.mxu0
    %v263 = vadd.f32 0.0, %v262
    %v264 = vpop.f32.mrf.mxu0
    %265 = vdwg.mxu0
    %v266 = vadd.f32 %v247, %v263
    %v267 = vtanh.pop %v266
    %v268 = vstv %s222
    %vm269 = vcmp.lt.s32.totalorder %v268, %v72
    %v270 = vsel %vm269, 1, 0
    %271 = vset.pattern.permute.xlu0 0
    %272 = vperm.xlu0 %271, %v270
    %v273 = vpop.permute.xlu0 %272
    %vm274 = vcmp.eq.s32.totalorder %v273, 1
    %v275 = vsel %vm274, %v267, 0.0
    %277 = vrot.lane.b32.xlu0 %v275, 64
    %v278 = vpop.permute.xlu0 %277
    %vm280 = vcmask 785920
    %281 = vst.msk [vmem:[#allocation8] sm:$0xff] %vm280, %v278
    %vm282 = vcmp.eq.s32.totalorder %v268, %v143
    %v283 = vld [vmem:[#allocation9] sm:$0xff]
    %v284 = vsel %vm282, 1, 0
    %285 = vset.pattern.permute.xlu0 0
    %286 = vperm.xlu0 %285, %v284
    %v287 = vpop.permute.xlu0 %286
    %vm288 = vcmp.eq.s32.totalorder %v287, 1
    %v289 = vsel %vm288, %v267, %v283
    %290 = vst.msk [vmem:[#allocation9] sm:$0xff] %vm115, %v289
    %s291 = sadd.s32 %s73, 3
    %v292 = vld [vmem:[%s0] sm:$0xff]
    %294 = vrot.lane.b32.xlu0 %v292, 80
    %v295 = vpop.permute.xlu0 %294
    %v296 = vsel %vm78, %v295, 0
    %298 = vmatpush.msra.mxu0 0.0
    %299 = vmatpush.msra.mxu0 0.0
    %300 = vmatpush.msra.mxu0 0.0
    %301 = vmatpush.msra.mxu0 0.0
    %302 = vmatpush.msra.mxu0 0.0
    %303 = vmatpush.msra.mxu0 0.0
    %304 = vmatpush.msra.mxu0 0.0
    %305 = vmatpush.msra.mxu0 0.0
    %306 = vmatpush.msra.mxu0 0.0
    %307 = vmatpush.msra.mxu0 0.0
    %308 = vmatpush.msra.mxu0 0.0
    %309 = vmatpush.msra.mxu0 0.0
    %310 = vmatpush.msra.mxu0 0.0
    %311 = vmatpush.msra.mxu0 0.0
    %312 = vmatpush.msra.mxu0 %v70
    %313 = vmatpush.msra.mxu0 %v69
    %314 = vmatmul.f32.gmra.mxu0 %v296
    %v315 = vpop.f32.mrf.mxu0
    %v316 = vadd.f32 %v76, %v315
    %317 = vdwg.mxu0
    %v318 = vpack.c.bf16 %v267, %v267
    %v320 = vsel %vm115, %v318, 0
    %322 = vmatpush.bf16.msra.mxu0 0
    %323 = vmatpush.bf16.msra.mxu0 0
    %324 = vmatpush.bf16.msra.mxu0 0
    %325 = vmatpush.bf16.msra.mxu0 0
    %326 = vmatpush.bf16.msra.mxu0 0
    %327 = vmatpush.bf16.msra.mxu0 0
    %328 = vmatpush.bf16.msra.mxu0 %v112
    %329 = vmatpush.bf16.msra.mxu0 %v111
    %330 = vmatmul.bf16.gmra.mxu0 %v320
    %v331 = vpop.f32.mrf.mxu0
    %v332 = vadd.f32 0.0, %v331
    %v333 = vpop.f32.mrf.mxu0
    %334 = vdwg.mxu0
    %v335 = vadd.f32 %v316, %v332
    %v336 = vtanh.pop %v335
    %v337 = vstv %s291
    %vm338 = vcmp.lt.s32.totalorder %v337, %v72
    %v339 = vsel %vm338, 1, 0
    %340 = vset.pattern.permute.xlu0 0
    %341 = vperm.xlu0 %340, %v339
    %v342 = vpop.permute.xlu0 %341
    %vm343 = vcmp.eq.s32.totalorder %v342, 1
    %v344 = vsel %vm343, %v336, 0.0
    %346 = vrot.lane.b32.xlu0 %v344, 96
    %v347 = vpop.permute.xlu0 %346
    %vm349 = vcmask 1048320
    %350 = vst.msk [vmem:[#allocation8] sm:$0xff] %vm349, %v347
    %vm351 = vcmp.eq.s32.totalorder %v337, %v143
    %v352 = vld [vmem:[#allocation9] sm:$0xff]
    %v353 = vsel %vm351, 1, 0
    %354 = vset.pattern.permute.xlu0 0
    %355 = vperm.xlu0 %354, %v353
    %v356 = vpop.permute.xlu0 %355
    %vm357 = vcmp.eq.s32.totalorder %v356, 1
    %v358 = vsel %vm357, %v336, %v352
    %359 = vst.msk [vmem:[#allocation9] sm:$0xff] %vm115, %v358
    %s360 = sadd.s32 %s73, 4
    %v361 = vld [vmem:[%s0] sm:$0xff]
    %363 = vrot.lane.b32.xlu0 %v361, 64
    %v364 = vpop.permute.xlu0 %363
    %v365 = vsel %vm78, %v364, 0
    %367 = vmatpush.msra.mxu0 0.0
    %368 = vmatpush.msra.mxu0 0.0
    %369 = vmatpush.msra.mxu0 0.0
    %370 = vmatpush.msra.mxu0 0.0
    %371 = vmatpush.msra.mxu0 0.0
    %372 = vmatpush.msra.mxu0 0.0
    %373 = vmatpush.msra.mxu0 0.0
    %374 = vmatpush.msra.mxu0 0.0
    %375 = vmatpush.msra.mxu0 0.0
    %376 = vmatpush.msra.mxu0 0.0
    %377 = vmatpush.msra.mxu0 0.0
    %378 = vmatpush.msra.mxu0 0.0
    %379 = vmatpush.msra.mxu0 0.0
    %380 = vmatpush.msra.mxu0 0.0
    %381 = vmatpush.msra.mxu0 %v70
    %382 = vmatpush.msra.mxu0 %v69
    %383 = vmatmul.f32.gmra.mxu0 %v365
    %v384 = vpop.f32.mrf.mxu0
    %v385 = vadd.f32 %v76, %v384
    %386 = vdwg.mxu0
    %v387 = vpack.c.bf16 %v336, %v336
    %v389 = vsel %vm115, %v387, 0
    %391 = vmatpush.bf16.msra.mxu0 0
    %392 = vmatpush.bf16.msra.mxu0 0
    %393 = vmatpush.bf16.msra.mxu0 0
    %394 = vmatpush.bf16.msra.mxu0 0
    %395 = vmatpush.bf16.msra.mxu0 0
    %396 = vmatpush.bf16.msra.mxu0 0
    %397 = vmatpush.bf16.msra.mxu0 %v112
    %398 = vmatpush.bf16.msra.mxu0 %v111
    %399 = vmatmul.bf16.gmra.mxu0 %v389
    %v400 = vpop.f32.mrf.mxu0
    %v401 = vadd.f32 0.0, %v400
    %v402 = vpop.f32.mrf.mxu0
    %403 = vdwg.mxu0
    %v404 = vadd.f32 %v385, %v401
    %v405 = vtanh.pop %v404
    %v406 = vstv %s360
    %vm407 = vcmp.lt.s32.totalorder %v406, %v72
    %v408 = vsel %vm407, 1, 0
    %409 = vset.pattern.permute.xlu0 0
    %410 = vperm.xlu0 %409, %v408
    %v411 = vpop.permute.xlu0 %410
    %vm412 = vcmp.eq.s32.totalorder %v411, 1
    %v413 = vsel %vm412, %v405, 0.0
    %414 = vst.msk [vmem:[#allocation8 + $0x8] sm:$0xff] %vm115, %v413
    %vm415 = vcmp.eq.s32.totalorder %v406, %v143
    %v416 = vld [vmem:[#allocation9] sm:$0xff]
    %v417 = vsel %vm415, 1, 0
    %418 = vset.pattern.permute.xlu0 0
    %419 = vperm.xlu0 %418, %v417
    %v420 = vpop.permute.xlu0 %419
    %vm421 = vcmp.eq.s32.totalorder %v420, 1
    %v422 = vsel %vm421, %v405, %v416
    %423 = vst.msk [vmem:[#allocation9] sm:$0xff] %vm115, %v422
    %s424 = sadd.s32 %s73, 5
    %v425 = vld [vmem:[%s0] sm:$0xff]
    %427 = vrot.lane.b32.xlu0 %v425, 48
    %v428 = vpop.permute.xlu0 %427
    %v429 = vsel %vm78, %v428, 0
    %431 = vmatpush.msra.mxu0 0.0
    %432 = vmatpush.msra.mxu0 0.0
    %433 = vmatpush.msra.mxu0 0.0
    %434 = vmatpush.msra.mxu0 0.0
    %435 = vmatpush.msra.mxu0 0.0
    %436 = vmatpush.msra.mxu0 0.0
    %437 = vmatpush.msra.mxu0 0.0
    %438 = vmatpush.msra.mxu0 0.0
    %439 = vmatpush.msra.mxu0 0.0
    %440 = vmatpush.msra.mxu0 0.0
    %441 = vmatpush.msra.mxu0 0.0
    %442 = vmatpush.msra.mxu0 0.0
    %443 = vmatpush.msra.mxu0 0.0
    %444 = vmatpush.msra.mxu0 0.0
    %445 = vmatpush.msra.mxu0 %v70
    %446 = vmatpush.msra.mxu0 %v69
    %447 = vmatmul.f32.gmra.mxu0 %v429
    %v448 = vpop.f32.mrf.mxu0
    %v449 = vadd.f32 %v76, %v448
    %450 = vdwg.mxu0
    %v451 = vpack.c.bf16 %v405, %v405
    %v453 = vsel %vm115, %v451, 0
    %455 = vmatpush.bf16.msra.mxu0 0
    %456 = vmatpush.bf16.msra.mxu0 0
    %457 = vmatpush.bf16.msra.mxu0 0
    %458 = vmatpush.bf16.msra.mxu0 0
    %459 = vmatpush.bf16.msra.mxu0 0
    %460 = vmatpush.bf16.msra.mxu0 0
    %461 = vmatpush.bf16.msra.mxu0 %v112
    %462 = vmatpush.bf16.msra.mxu0 %v111
    %463 = vmatmul.bf16.gmra.mxu0 %v453
    %v464 = vpop.f32.mrf.mxu0
    %v465 = vadd.f32 0.0, %v464
    %v466 = vpop.f32.mrf.mxu0
    %467 = vdwg.mxu0
    %v468 = vadd.f32 %v449, %v465
    %v469 = vtanh.pop %v468
    %v470 = vstv %s424
    %vm471 = vcmp.lt.s32.totalorder %v470, %v72
    %v472 = vsel %vm471, 1, 0
    %473 = vset.pattern.permute.xlu0 0
    %474 = vperm.xlu0 %473, %v472
    %v475 = vpop.permute.xlu0 %474
    %vm476 = vcmp.eq.s32.totalorder %v475, 1
    %v477 = vsel %vm476, %v469, 0.0
    %479 = vrot.lane.b32.xlu0 %v477, 32
    %v480 = vpop.permute.xlu0 %479
    %482 = vst.msk [vmem:[#allocation8 + $0x8] sm:$0xff] %vm211, %v480
    %vm483 = vcmp.eq.s32.totalorder %v470, %v143
    %v484 = vld [vmem:[#allocation9] sm:$0xff]
    %v485 = vsel %vm483, 1, 0
    %486 = vset.pattern.permute.xlu0 0
    %487 = vperm.xlu0 %486, %v485
    %v488 = vpop.permute.xlu0 %487
    %vm489 = vcmp.eq.s32.totalorder %v488, 1
    %v490 = vsel %vm489, %v469, %v484
    %491 = vst.msk [vmem:[#allocation9] sm:$0xff] %vm115, %v490
    %s492 = sadd.s32 %s73, 6
    %v493 = vld [vmem:[%s0] sm:$0xff]
    %495 = vrot.lane.b32.xlu0 %v493, 32
    %v496 = vpop.permute.xlu0 %495
    %v497 = vsel %vm78, %v496, 0
    %499 = vmatpush.msra.mxu0 0.0
    %500 = vmatpush.msra.mxu0 0.0
    %501 = vmatpush.msra.mxu0 0.0
    %502 = vmatpush.msra.mxu0 0.0
    %503 = vmatpush.msra.mxu0 0.0
    %504 = vmatpush.msra.mxu0 0.0
    %505 = vmatpush.msra.mxu0 0.0
    %506 = vmatpush.msra.mxu0 0.0
    %507 = vmatpush.msra.mxu0 0.0
    %508 = vmatpush.msra.mxu0 0.0
    %509 = vmatpush.msra.mxu0 0.0
    %510 = vmatpush.msra.mxu0 0.0
    %511 = vmatpush.msra.mxu0 0.0
    %512 = vmatpush.msra.mxu0 0.0
    %513 = vmatpush.msra.mxu0 %v70
    %514 = vmatpush.msra.mxu0 %v69
    %515 = vmatmul.f32.gmra.mxu0 %v497
    %v516 = vpop.f32.mrf.mxu0
    %v517 = vadd.f32 %v76, %v516
    %518 = vdwg.mxu0
    %v519 = vpack.c.bf16 %v469, %v469
    %v521 = vsel %vm115, %v519, 0
    %523 = vmatpush.bf16.msra.mxu0 0
    %524 = vmatpush.bf16.msra.mxu0 0
    %525 = vmatpush.bf16.msra.mxu0 0
    %526 = vmatpush.bf16.msra.mxu0 0
    %527 = vmatpush.bf16.msra.mxu0 0
    %528 = vmatpush.bf16.msra.mxu0 0
    %529 = vmatpush.bf16.msra.mxu0 %v112
    %530 = vmatpush.bf16.msra.mxu0 %v111
    %531 = vmatmul.bf16.gmra.mxu0 %v521
    %v532 = vpop.f32.mrf.mxu0
    %v533 = vadd.f32 0.0, %v532
    %v534 = vpop.f32.mrf.mxu0
    %535 = vdwg.mxu0
    %v536 = vadd.f32 %v517, %v533
    %v537 = vtanh.pop %v536
    %v538 = vstv %s492
    %vm539 = vcmp.lt.s32.totalorder %v538, %v72
    %v540 = vsel %vm539, 1, 0
    %541 = vset.pattern.permute.xlu0 0
    %542 = vperm.xlu0 %541, %v540
    %v543 = vpop.permute.xlu0 %542
    %vm544 = vcmp.eq.s32.totalorder %v543, 1
    %v545 = vsel %vm544, %v537, 0.0
    %547 = vrot.lane.b32.xlu0 %v545, 64
    %v548 = vpop.permute.xlu0 %547
    %550 = vst.msk [vmem:[#allocation8 + $0x8] sm:$0xff] %vm280, %v548
    %vm551 = vcmp.eq.s32.totalorder %v538, %v143
    %v552 = vld [vmem:[#allocation9] sm:$0xff]
    %v553 = vsel %vm551, 1, 0
    %554 = vset.pattern.permute.xlu0 0
    %555 = vperm.xlu0 %554, %v553
    %v556 = vpop.permute.xlu0 %555
    %vm557 = vcmp.eq.s32.totalorder %v556, 1
    %v558 = vsel %vm557, %v537, %v552
    %559 = vst.msk [vmem:[#allocation9] sm:$0xff] %vm115, %v558
    %s560 = sadd.s32 %s73, 7
    %v561 = vld [vmem:[%s0] sm:$0xff]
    %563 = vrot.lane.b32.xlu0 %v561, 16
    %v564 = vpop.permute.xlu0 %563
    %v565 = vsel %vm78, %v564, 0
    %567 = vmatpush.msra.mxu0 0.0
    %568 = vmatpush.msra.mxu0 0.0
    %569 = vmatpush.msra.mxu0 0.0
    %570 = vmatpush.msra.mxu0 0.0
    %571 = vmatpush.msra.mxu0 0.0
    %572 = vmatpush.msra.mxu0 0.0
    %573 = vmatpush.msra.mxu0 0.0
    %574 = vmatpush.msra.mxu0 0.0
    %575 = vmatpush.msra.mxu0 0.0
    %576 = vmatpush.msra.mxu0 0.0
    %577 = vmatpush.msra.mxu0 0.0
    %578 = vmatpush.msra.mxu0 0.0
    %579 = vmatpush.msra.mxu0 0.0
    %580 = vmatpush.msra.mxu0 0.0
    %581 = vmatpush.msra.mxu0 %v70
    %582 = vmatpush.msra.mxu0 %v69
    %583 = vmatmul.f32.gmra.mxu0 %v565
    %v584 = vpop.f32.mrf.mxu0
    %v585 = vadd.f32 %v76, %v584
    %586 = vdwg.mxu0
    %v587 = vpack.c.bf16 %v537, %v537
    %v589 = vsel %vm115, %v587, 0
    %591 = vmatpush.bf16.msra.mxu0 0
    %592 = vmatpush.bf16.msra.mxu0 0
    %593 = vmatpush.bf16.msra.mxu0 0
    %594 = vmatpush.bf16.msra.mxu0 0
    %595 = vmatpush.bf16.msra.mxu0 0
    %596 = vmatpush.bf16.msra.mxu0 0
    %597 = vmatpush.bf16.msra.mxu0 %v112
    %598 = vmatpush.bf16.msra.mxu0 %v111
    %599 = vmatmul.bf16.gmra.mxu0 %v589
    %v600 = vpop.f32.mrf.mxu0
    %v601 = vadd.f32 0.0, %v600
    %v602 = vpop.f32.mrf.mxu0
    %603 = vdwg.mxu0
    %v604 = vadd.f32 %v585, %v601
    %v605 = vtanh.pop %v604
    %v606 = vstv %s560
    %vm607 = vcmp.lt.s32.totalorder %v606, %v72
    %v608 = vsel %vm607, 1, 0
    %609 = vset.pattern.permute.xlu0 0
    %610 = vperm.xlu0 %609, %v608
    %v611 = vpop.permute.xlu0 %610
    %vm612 = vcmp.eq.s32.totalorder %v611, 1
    %v613 = vsel %vm612, %v605, 0.0
    %615 = vrot.lane.b32.xlu0 %v613, 96
    %v616 = vpop.permute.xlu0 %615
    %618 = vst.msk [vmem:[#allocation8 + $0x8] sm:$0xff] %vm349, %v616
    %vm619 = vcmp.eq.s32.totalorder %v606, %v143
    %v620 = vld [vmem:[#allocation9] sm:$0xff]
    %v621 = vsel %vm619, 1, 0
    %622 = vset.pattern.permute.xlu0 0
    %623 = vperm.xlu0 %622, %v621
    %v624 = vpop.permute.xlu0 %623
    %vm625 = vcmp.eq.s32.totalorder %v624, 1
    %v626 = vsel %vm625, %v605, %v620
    %627 = vst.msk [vmem:[#allocation9] sm:$0xff] %vm115, %v626
    %628 = vst.msk [vmem:[#allocation2] sm:$0xff] %vm115, %v605
    // Predicated region
    $region34: #{tpu_custom_call.1} parent=1 // pred_check
      _
    $region35: #{tpu_custom_call.1} parent=1 // pred_check_branch
      %630 = sbr.rel (0) target = $region37
    $region36: #{tpu_custom_call.1} parent=1 // pred_region
      %632 = vsyncadd [#allocation5], 0
      %s634 = sshll.u32 [#allocation8], 4
      %s635 = int_to_ptr.vmem [resolvable:$true] %s634
      %s636 = sshll.u32 %s5, 4
      %s637 = int_to_ptr.hbm [resolvable:$true] %s636
      %639 = dma.vmem_to_hbm [thread:$0]  %s635, 256, %s637, [#allocation5]
    $region37: #{tpu_custom_call.1} parent=1 // pred_fallthru
      _
    // Predicated region
    $region38: #{tpu_custom_call.1} parent=1 // pred_check
      _
    $region39: #{tpu_custom_call.1} parent=1 // pred_check_branch
      %641 = sbr.rel (0) target = $region41
    $region40: #{tpu_custom_call.1} parent=1 // pred_region
      %643 = vsyncadd [#allocation10], 0
      %s645 = sshll.u32 [#allocation9], 4
      %s646 = int_to_ptr.vmem [resolvable:$true] %s645
      %s647 = sshll.u32 %s6, 4
      %s648 = int_to_ptr.hbm [resolvable:$true] %s647
      %650 = dma.vmem_to_hbm [thread:$0]  %s646, 128, %s648, [#allocation10]
    $region41: #{tpu_custom_call.1} parent=1 // pred_fallthru
      _
    // Predicated region
    $region42: #{tpu_custom_call.1} parent=1 // pred_check
      _
    $region43: #{tpu_custom_call.1} parent=1 // pred_check_branch
      %652 = sbr.rel (0) target = $region45
    $region44: #{tpu_custom_call.1} parent=1 // pred_region
      %654 = dma.done [#allocation5], 256
    $region45: #{tpu_custom_call.1} parent=1 // pred_fallthru
      _
    // Predicated region
    $region46: #{tpu_custom_call.1} parent=1 // pred_check
      _
    $region47: #{tpu_custom_call.1} parent=1 // pred_check_branch
      %656 = sbr.rel (0) target = $region49
    $region48: #{tpu_custom_call.1} parent=1 // pred_region
      %658 = dma.done [#allocation10], 128
    $region49: #{tpu_custom_call.1} parent=1 // pred_fallthru
      _
    %659 = vsyncpa [#allocation4], 1
    %660 = vsyncpa [#allocation7], 1
    %661 = vsyncpa [#allocation5], 1
    %662 = vsyncpa [#allocation10], 1

</llo_original>
